<compile_context>
chip_gen: v6e
topology: v6e:2x2x1
jax: 0.10.0
libtpu: 0.0.40
codegen_flags: <defaults>
</compile_context>

<pallas_src>
import jax
import jax.numpy as jnp
from jax.experimental import pallas as pl
from jax.experimental.pallas import tpu as pltpu

_LANE = 128
_SUB = 8


def _round_up(x: int, m: int) -> int:
    return ((x + m - 1) // m) * m


def _vmem_limit_bytes() -> int:
    """Generation-sized VMEM limit (96 MiB on v5e/v6e, 48 MiB on v7x-class)."""
    try:
        cap = int(pltpu.get_tpu_info().vmem_capacity_bytes)
    except Exception:
        cap = 64 * 1024 * 1024  # conservative fallback (v7x physical VMEM)
    return int(min(cap * 3 // 4, 100 * 1024 * 1024))


def _resident_block_spec(block_shape, index_map):
    """BlockSpec for a block whose index never changes: single pipeline buffer."""
    if hasattr(pl, "Buffered"):
        try:
            return pl.BlockSpec(block_shape, index_map, pipeline_mode=pl.Buffered(1))
        except TypeError:  # older jax without pipeline_mode on BlockSpec
            pass
    return pl.BlockSpec(block_shape, index_map)


# ---------------------------------------------------------------------------
# softmax(weight, axis=0): one-shot (or C-tiled) kernel, exact division.
# ---------------------------------------------------------------------------
def _softmax0_kernel(w_ref, o_ref):
    w = w_ref[...].astype(jnp.float32)
    w = w - jnp.max(w, axis=0, keepdims=True)
    e = jnp.exp(w)
    # Exact divide: this runs once per call, so the approx-EUP reciprocal buys
    # nothing and would only inject ~1e-3 relative error into every output.
    o_ref[...] = (e / jnp.sum(e, axis=0, keepdims=True)).astype(o_ref.dtype)


def _softmax_columns(weight: jax.Array, out_dtype) -> jax.Array:
    K, C = weight.shape
    w_item = jnp.dtype(weight.dtype).itemsize
    o_item = jnp.dtype(out_dtype).itemsize
    cost = pl.CostEstimate(flops=4 * K * C, transcendentals=K * C,
                           bytes_accessed=K * C * (w_item + o_item))

    # Tile over C only when the whole weight would strain VMEM.
    if C % _LANE == 0 and K * C * 4 > 16 * 1024 * 1024:
        tc = 8 * _LANE
        return pl.pallas_call(
            _softmax0_kernel,
            out_shape=jax.ShapeDtypeStruct((K, C), out_dtype),
            grid=(pl.cdiv(C, tc),),
            in_specs=[pl.BlockSpec((K, tc), lambda j: (0, j))],
            out_specs=pl.BlockSpec((K, tc), lambda j: (0, j)),
            compiler_params=pltpu.CompilerParams(dimension_semantics=("parallel",)),
            cost_estimate=cost,
        )(weight)

    # One shot: whole [K, C] block (fine for typical attention-weight sizes).
    # TODO(synk): a huge K with C not a multiple of 128 would need a lane-padded
    # tiled path; not needed for this module's sizes.
    return pl.pallas_call(
        _softmax0_kernel,
        out_shape=jax.ShapeDtypeStruct((K, C), out_dtype),
        in_specs=[pl.BlockSpec((K, C), lambda: (0, 0))],
        out_specs=pl.BlockSpec((K, C), lambda: (0, 0)),
        cost_estimate=cost,
    )(weight)


# ---------------------------------------------------------------------------
# Streaming matmul: det_score [N, K] @ softmax(weight) [K, C] -> [N, C]
# ---------------------------------------------------------------------------
def _weighted_score_kernel(x_ref, w_ref, o_ref):
    # x_ref: (TN, K) det_score tile; w_ref: (K, TC) softmaxed weight block.
    x = x_ref[...]
    precision = jax.lax.Precision.HIGHEST if x.dtype == jnp.float32 else None
    acc = jnp.dot(x, w_ref[...], precision=precision,
                  preferred_element_type=jnp.float32)
    o_ref[...] = acc.astype(o_ref.dtype)


def attention_layer(det_score: jax.Array, weight: jax.Array, *,
                    block_n: int = 4096) -> jax.Array:
    """det_score: [N, K], weight: [K, C] -> [N, C] (softmax over K, then matmul)."""
    N, K = det_score.shape
    K2, C = weight.shape
    assert K == K2, "det_score last dim must match weight first dim"

    out_dtype = det_score.dtype
    x_item = jnp.dtype(det_score.dtype).itemsize
    o_item = jnp.dtype(out_dtype).itemsize

    # One-time column softmax in its own kernel, stored directly in the MXU
    # compute dtype so the steady-state loop is pure vld + vmatmul + vst.
    w_soft = _softmax_columns(weight, out_dtype)
    w_item = jnp.dtype(w_soft.dtype).itemsize

    vmem_limit = _vmem_limit_bytes()
    tile_budget = (vmem_limit * 4) // 5          # headroom for compiler scratch

    # --- C tile: keep the whole softmaxed weight resident when it fits in
    #     about half the budget; otherwise tile C in 128-lane chunks (v7x guard).
    if K * C * w_item <= tile_budget // 2 or C < _LANE:
        tc = C
    else:
        tc = (tile_budget // 2) // (2 * K * w_item)   # double-buffered chunk
        tc = max(_LANE, (tc // _LANE) * _LANE)
        tc = min(tc, C)
    grid_c = pl.cdiv(C, tc)
    single_buffer_w = (grid_c == 1)
    w_bufs = 1 if single_buffer_w else 2

    # --- N tile: as large as the remaining VMEM allows (aim for >= 1-2 MB per
    #     grid step), on the 8-sublane grain; Pallas masks the ragged last block.
    resident_w = w_bufs * K * tc * w_item
    per_row = 2 * (K * x_item + tc * o_item)          # double-buffered in + out
    tn_cap = max(_SUB, (tile_budget - resident_w) // per_row)
    tn = int(min(block_n, tn_cap, _round_up(N, _SUB)))
    tn = max(_SUB, (tn // _SUB) * _SUB)
    grid_n = pl.cdiv(N, tn)

    if single_buffer_w:
        # Constant block index -> second pipeline buffer would never be used.
        w_spec = _resident_block_spec((K, tc), lambda c, i: (0, c))
    else:
        w_spec = pl.BlockSpec((K, tc), lambda c, i: (0, c))

    grid_spec = pltpu.PrefetchScalarGridSpec(
        num_scalar_prefetch=0,
        grid=(grid_c, grid_n),                        # inner axis = N: weight block reused
        in_specs=[
            pl.BlockSpec((tn, K), lambda c, i: (i, 0)),   # det_score streams over N
            w_spec,                                       # softmaxed weight (resident)
        ],
        out_specs=pl.BlockSpec((tn, tc), lambda c, i: (i, c)),
    )

    cost = pl.CostEstimate(
        flops=2 * N * K * C,
        transcendentals=0,
        bytes_accessed=N * K * x_item + K * C * w_item + N * C * o_item,
    )

    return pl.pallas_call(
        _weighted_score_kernel,
        out_shape=jax.ShapeDtypeStruct((N, C), out_dtype),
        grid_spec=grid_spec,
        compiler_params=pltpu.CompilerParams(
            # Softmax is hoisted, so there is no cross-step state: both axes can
            # be parallel (shards the N loop across v7x's two TensorCores).
            dimension_semantics=("parallel", "parallel"),
            vmem_limit_bytes=vmem_limit,
        ),
        cost_estimate=cost,
    )(det_score, w_soft)


if __name__ == "__main__":
    # Small shapes consistent with the module: det_score [N, K], weight [K, C].
    N, K, C = 64, 16, 32

    key = jax.random.PRNGKey(0)
    k1, k2 = jax.random.split(key)
    det_score = jax.random.normal(k1, (N, K), dtype=jnp.float32)
    # Random weight so the softmax max/exp/normalize path is actually exercised
    # (the original module initializes to a constant -> uniform softmax).
    weight = 0.5 * jax.random.normal(k2, (K, C), dtype=jnp.float32)

    out = attention_layer(det_score, weight)
    out = jax.block_until_ready(out)

    # Pure-JAX reference (softmax over K, then matmul) at full f32 precision.
    ref = jnp.dot(det_score, jax.nn.softmax(weight, axis=0),
                  precision=jax.lax.Precision.HIGHEST)
    assert out.shape == (N, C)
    err = float(jnp.max(jnp.abs(out - ref)))
    assert err < 1e-4, f"mismatch vs reference: max abs err = {err}"

    print("KERNEL_OK")
</pallas_src>

<mosaic_0001>
module attributes {stable_mosaic.version = 11 : i64} {
  func.func @_softmax0_kernel(%arg0: memref<16x32xf32, #tpu.memory_space<vmem>>, %arg1: memref<16x32xf32, #tpu.memory_space<vmem>>) attributes {dimension_semantics = [], scalar_prefetch = 0 : i64, scratch_operands = 0 : i64, tpu.core_type = #tpu.core_type<tc>} {
    %c0 = arith.constant 0 : index
    %c0_0 = arith.constant 0 : index
    %0 = vector.load %arg0[%c0, %c0_0] : memref<16x32xf32, #tpu.memory_space<vmem>>, vector<16x32xf32>
    %cst = arith.constant dense<0xFF800000> : vector<32xf32>
    %1 = vector.multi_reduction <maximumf>, %0, %cst [0] : vector<16x32xf32> to vector<32xf32>
    %2 = vector.shape_cast %1 : vector<32xf32> to vector<1x32xf32>
    %3 = vector.broadcast %2 : vector<1x32xf32> to vector<16x32xf32>
    %4 = arith.subf %0, %3 : vector<16x32xf32>
    %5 = math.exp %4 : vector<16x32xf32>
    %cst_1 = arith.constant dense<0.000000e+00> : vector<32xf32>
    %6 = vector.multi_reduction <add>, %5, %cst_1 [0] : vector<16x32xf32> to vector<32xf32>
    %7 = vector.shape_cast %6 : vector<32xf32> to vector<1x32xf32>
    %8 = vector.broadcast %7 : vector<1x32xf32> to vector<16x32xf32>
    %9 = arith.divf %5, %8 : vector<16x32xf32>
    %c0_2 = arith.constant 0 : index
    %c0_3 = arith.constant 0 : index
    %10 = vector.load %arg1[%c0_2, %c0_3] : memref<16x32xf32, #tpu.memory_space<vmem>>, vector<16x32xf32>
    tpu.vector_store %arg1[%c0_2, %c0_3], %9 {strides = array<i32>} : memref<16x32xf32, #tpu.memory_space<vmem>>, vector<16x32xf32>,
    return
  }
}

</mosaic_0001>

<llo_original>
// kernel: tpu_custom_call.1
$region0: #{tpu_custom_call.1}
  #allocation0 [shape = 'u32[]', space=smem, size = 0x4, offset = 0x4, fixed_abs, tag = 'smem constant byte address 0x4 - core index']
  #allocation1 [shape = 'u32[144,128]{1,0:T(1,128)}', space=vmem, size = 0x12000, scoped, tag = 'internal scratch']
  %s0 = inlined_call_operand.hbm [shape: f32[16,32], index: 0, kind: input, shape index: {}]
  %s1 = inlined_call_operand.hbm [shape: f32[16,32], index: 1, kind: output, shape index: {}]
  %s2 = sld [smem:[#allocation0]]
  $region18: #{tpu_custom_call.1} parent=0
    _
  %s4 = ssub.s32 1, %s2
  %s5 = scalar_select 0, %s4, %s2
  $region1: #{tpu_custom_call.1} parent=0
    #allocation2 [shape = 'u8[8192]{0}', space=vmem, size = 0x2000, scoped, tag = 'input window, operand 0, single buffered']
    #allocation3 [shape = 's32[1]{0}', space=sflag, size = 0x4, scoped, tag = 'scoped memory for tpu_custom_call.1']
    #allocation4 [shape = 's32[1]{0}', space=sflag, size = 0x4, scoped, tag = 'scoped memory for tpu_custom_call.1']
    #allocation5 [shape = 'u8[8192]{0}', space=vmem, size = 0x2000, scoped, tag = 'output window, operand 0, single buffered']
    %6 = vsyncpa [#allocation3], 0
    %7 = vsyncpa [#allocation4], 0
    // Predicated region
    $region2: #{tpu_custom_call.1} parent=1 // pred_check
      _
    $region3: #{tpu_custom_call.1} parent=1 // pred_check_branch
      %9 = sbr.rel (0) target = $region5
    $region4: #{tpu_custom_call.1} parent=1 // pred_region
      %s11 = ssub.s32 256, 256
      %12 = vsyncadd [#allocation3], %s11
      %s13 = sshll.u32 [#allocation2], 4
      %s14 = int_to_ptr.vmem [resolvable:$true] %s13
      %19 = dma.hbm_to_vmem [thread:$0]  %s0, 256, %s14, [#allocation3], 128, 128, 8
    $region5: #{tpu_custom_call.1} parent=1 // pred_fallthru
      _
    // Predicated region
    $region6: #{tpu_custom_call.1} parent=1 // pred_check
      _
    $region7: #{tpu_custom_call.1} parent=1 // pred_check_branch
      %21 = sbr.rel (0) target = $region9
    $region8: #{tpu_custom_call.1} parent=1 // pred_region
      %22 = dma.done [#allocation3], 256
    $region9: #{tpu_custom_call.1} parent=1 // pred_fallthru
      _
    %v23 = vld [vmem:[#allocation2] sm:$0xff]
    %v24 = vld [vmem:[#allocation2 + $0x8] sm:$0xff]
    %vm25 = vcmask 261120
    %v26 = vsel %vm25, %v23, -inf
    %v27 = vsel %vm25, %v24, -inf
    %v28 = vmax.f32 %v26, %v27
    %v29 = vrot.slane %v28, 4
    %v30 = vmax.f32 %v28, %v29
    %v31 = vrot.slane %v30, 2
    %v32 = vmax.f32 %v30, %v31
    %v33 = vrot.slane %v32, 1
    %v34 = vmax.f32 %v32, %v33
    %v35 = vsub.f32 %v23, %v34
    %v36 = vsub.f32 %v24, %v34
    %v37 = vmul.f32 %v35, 1.442695
    %v38 = vpow.pop %v37
    %v39 = vmul.f32 %v36, 1.442695
    %v40 = vpow.pop %v39
    %v41 = vsel %vm25, %v38, 0.0
    %v42 = vsel %vm25, %v40, 0.0
    %v43 = vadd.f32 %v41, %v42
    %v44 = vrot.slane %v43, 4
    %v45 = vadd.f32 %v43, %v44
    %v46 = vrot.slane %v45, 2
    %v47 = vadd.f32 %v45, %v46
    %v48 = vrot.slane %v47, 1
    %v49 = vadd.f32 %v47, %v48
    %v50 = vrcp.pop %v49
    %v51 = vmul.f32 %v38, %v50
    %v52 = vmul.f32 %v40, %v50
    %53 = vst.msk [vmem:[#allocation5] sm:$0xff] %vm25, %v51
    %54 = vst.msk [vmem:[#allocation5 + $0x8] sm:$0xff] %vm25, %v52
    // Predicated region
    $region10: #{tpu_custom_call.1} parent=1 // pred_check
      _
    $region11: #{tpu_custom_call.1} parent=1 // pred_check_branch
      %56 = sbr.rel (0) target = $region13
    $region12: #{tpu_custom_call.1} parent=1 // pred_region
      %s58 = ssub.s32 256, 256
      %59 = vsyncadd [#allocation4], %s58
      %s60 = sshll.u32 [#allocation5], 4
      %s61 = int_to_ptr.vmem [resolvable:$true] %s60
      %66 = dma.vmem_to_hbm [thread:$0]  %s61, 256, %s1, [#allocation4], 128, 128, 8
    $region13: #{tpu_custom_call.1} parent=1 // pred_fallthru
      _
    // Predicated region
    $region14: #{tpu_custom_call.1} parent=1 // pred_check
      _
    $region15: #{tpu_custom_call.1} parent=1 // pred_check_branch
      %68 = sbr.rel (0) target = $region17
    $region16: #{tpu_custom_call.1} parent=1 // pred_region
      %69 = dma.done [#allocation4], 256
    $region17: #{tpu_custom_call.1} parent=1 // pred_fallthru
      _
    %70 = vsyncpa [#allocation3], 1
    %71 = vsyncpa [#allocation4], 1

</llo_original>
